<compile_context>
chip_gen: v5e
topology: v5e:2x2
jax: 0.10.0
libtpu: 0.0.40
codegen_flags: <defaults>
</compile_context>

<pallas_src>
import functools

import jax
import jax.numpy as jnp
from jax.experimental import pallas as pl
from jax.experimental.pallas import tpu as pltpu

NEG_SLOPE = 0.1       # nn.LeakyReLU(0.1)
_PAD_TAIL = 8         # spare elements at the end of each flat band (tap over-read)
_LANE = 128


def _round_up(v, m):
    return ((v + m - 1) // m) * m


def _cdiv(a, b):
    return -(-a // b)


# ----------------------------------------------------------------------------
# Pallas kernel: (optional pre-LeakyReLU) -> sum-over-taps shifted matmuls
#                -> +bias -> (optional post-LeakyReLU)
# ----------------------------------------------------------------------------
def _conv_tap_mm_kernel(x_ref, w_ref, b_ref, o_ref, *, taps, M, act_in, act_out):
    """x_ref: (NPH, L, Cin) bf16 phase-split flat band
       w_ref: (KH*KW, Cin, TCout) bf16
       b_ref: (1, TCout) f32
       o_ref: (M, TCout) f32"""
    xall = x_ref[...]
    if act_in:
        xall = jnp.where(xall >= 0, xall, NEG_SLOPE * xall)
    acc = jnp.zeros(o_ref.shape, jnp.float32)
    for t, (ph, off) in enumerate(taps):
        xs = xall[ph, off:off + M, :]                            # static slice
        acc = acc + jnp.dot(xs, w_ref[t], preferred_element_type=jnp.float32)
    y = acc + b_ref[...]
    if act_out:
        y = jnp.where(y >= 0, y, NEG_SLOPE * y)
    o_ref[...] = y


def _choose_band_rows(Ho, Wq, Cin, NPH, TCout, oi_max,
                      budget_bytes=12 * 1024 * 1024):
    """Largest output-row band whose double-buffered bf16 input band + f32
    output tile stays under a conservative VMEM budget (v7x has 64 MiB)."""
    tho = Ho
    while tho > 1:
        in_bytes = NPH * (tho + oi_max) * Wq * Cin * 2           # bf16 band
        out_bytes = tho * Wq * TCout * 4                         # f32 out tile
        if 2 * (in_bytes + out_bytes) <= budget_bytes:
            break
        tho = max(1, (tho + 1) // 2)
    return tho


# ----------------------------------------------------------------------------
# Conv wrapper: phase split (space-to-depth for stride), row banding, Pallas call
# ----------------------------------------------------------------------------
def conv2d(x, w, b, stride=1, pad=0, act_in=False, act_out=False):
    """x: NHWC float, w: torch layout (Cout, Cin, KH, KW).  Returns NHWC f32."""
    N, H, W, Cin = x.shape
    Cout, Cin_w, KH, KW = w.shape
    assert Cin == Cin_w
    s = stride

    Ho = (H + 2 * pad - KH) // s + 1
    Wo = (W + 2 * pad - KW) // s + 1

    Cout_p = _round_up(Cout, _LANE)                 # lane-dense output stores
    TCout = 256 if Cout_p % 256 == 0 else 128

    Hp = _round_up(H + 2 * pad, s)
    Wp = _round_up(W + 2 * pad, s)
    Hq, Wq = Hp // s, Wp // s
    NPH = s * s
    oi_max, oj_max = (KH - 1) // s, (KW - 1) // s

    THo = _choose_band_rows(Ho, Wq, Cin, NPH, TCout, oi_max)
    NB = _cdiv(Ho, THo)
    band_rows = THo + oi_max
    M = THo * Wq                                    # matmul M per band (Wq-Wo cols are junk)

    # ---- JAX-side prep: single ~1x copy of the padded input (no im2col) ----
    xp = jnp.pad(x, ((0, 0), (pad, Hp - H - pad), (pad, Wp - W - pad), (0, 0)))
    xq = xp.reshape(N, Hq, s, Wq, s, Cin).transpose(0, 2, 4, 1, 3, 5)
    xq = xq.reshape(N, NPH, Hq, Wq, Cin)            # phase (ki%s, kj%s) images
    rid = jnp.arange(NB)[:, None] * THo + jnp.arange(band_rows)[None, :]
    rid = jnp.clip(rid, 0, Hq - 1)
    xb = jnp.take(xq, rid.reshape(-1), axis=2)      # (N, NPH, NB*band_rows, Wq, Cin)
    xb = xb.reshape(N, NPH, NB, band_rows, Wq, Cin).transpose(0, 2, 1, 3, 4, 5)
    xb = xb.reshape(N, NB, NPH, band_rows * Wq, Cin)
    xb = jnp.pad(xb, ((0, 0), (0, 0), (0, 0), (0, _PAD_TAIL), (0, 0)))
    xb = xb.astype(jnp.bfloat16)
    L = band_rows * Wq + _PAD_TAIL

    wt = jnp.transpose(w, (2, 3, 1, 0)).reshape(KH * KW, Cin, Cout)
    wt = jnp.pad(wt, ((0, 0), (0, 0), (0, Cout_p - Cout))).astype(jnp.bfloat16)
    bias = jnp.pad(b.astype(jnp.float32), (0, Cout_p - Cout)).reshape(1, Cout_p)

    # tap (ki,kj) -> (phase index, flat shift inside the phase band)
    taps = tuple(((ki % s) * s + (kj % s), (ki // s) * Wq + (kj // s))
                 for ki in range(KH) for kj in range(KW))

    kernel = functools.partial(_conv_tap_mm_kernel, taps=taps, M=M,
                               act_in=act_in, act_out=act_out)

    out = pl.pallas_call(
        kernel,
        out_shape=jax.ShapeDtypeStruct((N, NB, M, Cout_p), jnp.float32),
        grid=(N, NB, Cout_p // TCout),
        in_specs=[
            pl.BlockSpec((None, None, NPH, L, Cin), lambda n, bb, c: (n, bb, 0, 0, 0)),
            pl.BlockSpec((KH * KW, Cin, TCout), lambda n, bb, c: (0, 0, c)),
            pl.BlockSpec((1, TCout), lambda n, bb, c: (0, c)),
        ],
        out_specs=pl.BlockSpec((None, None, M, TCout), lambda n, bb, c: (n, bb, 0, c)),
        compiler_params=pltpu.CompilerParams(
            dimension_semantics=("parallel", "parallel", "parallel"),
            vmem_limit_bytes=64 * 1024 * 1024),
    )(xb, wt, bias)

    y = out.reshape(N, NB * THo, Wq, Cout_p)[:, :Ho, :Wo, :Cout]
    return y


# ----------------------------------------------------------------------------
# JAX glue: avg-pool, head conv, spectral norm, params
# ----------------------------------------------------------------------------
def avg_pool2(x):
    """AvgPool2d(2,2) as a cheap reshape-mean (no patch expansion)."""
    N, H, W, C = x.shape
    x = x[:, :(H // 2) * 2, :(W // 2) * 2, :]
    return x.reshape(N, H // 2, 2, W // 2, 2, C).mean(axis=(2, 4))


def head_conv_1x1(x, w, b):
    """Cout=1 head: LeakyReLU then a plain XLA matvec (cheaper than a Pallas call)."""
    xl = jnp.where(x >= 0, x, NEG_SLOPE * x)
    wm = jnp.transpose(w.reshape(w.shape[0], w.shape[1]))       # (Cin, 1)
    return jnp.einsum("nhwc,co->nhwo", xl, wm) + b.reshape(1, 1, 1, -1)


def spectral_normalize(w, n_iter=30):
    """W / sigma_max(W.reshape(Cout, -1)) via deterministic power iteration.
    (PyTorch's spectral_norm does one iteration per forward with a persistent
    random u; this converged version differs slightly early in training.)"""
    cout = w.shape[0]
    wm = w.reshape(cout, -1)
    u = jnp.ones((cout,), jnp.float32) / jnp.sqrt(cout)
    for _ in range(n_iter):
        v = wm.T @ u
        v = v / (jnp.linalg.norm(v) + 1e-12)
        u = wm @ v
        u = u / (jnp.linalg.norm(u) + 1e-12)
    sigma = u @ (wm @ v)
    return w / sigma


def _make_conv_params(key, cout, cin, k, use_spect=True):
    kw_, kb_ = jax.random.split(key)
    w = 0.1 * jax.random.normal(kw_, (cout, cin, k, k), jnp.float32)
    b = 0.05 * jax.random.normal(kb_, (cout,), jnp.float32)
    if use_spect:
        w = spectral_normalize(w)
    return {"w": w, "b": b}


def init_res_discriminator_params(key, input_nc=3, ndf=64, img_f=1024, layers=3):
    params = {"layers": layers}
    keys = jax.random.split(key, 3 * layers + 1)
    ki = iter(range(len(keys)))
    params["block0"] = {
        "conv1": _make_conv_params(keys[next(ki)], ndf, input_nc, 3),
        "conv2": _make_conv_params(keys[next(ki)], ndf, ndf, 4),
        "bypass": _make_conv_params(keys[next(ki)], ndf, input_nc, 1),
    }
    mult = 1
    for i in range(layers - 1):
        mult_prev = mult
        mult = min(2 ** (i + 1), img_f // ndf)
        cin, cout, hid = ndf * mult_prev, ndf * mult, ndf * mult_prev
        params["encoder%d" % i] = {
            "conv1": _make_conv_params(keys[next(ki)], hid, cin, 3),
            "conv2": _make_conv_params(keys[next(ki)], cout, hid, 4),
            "bypass": _make_conv_params(keys[next(ki)], cout, cin, 1),
        }
    params["conv"] = _make_conv_params(keys[next(ki)], 1, ndf * mult, 1)
    return params


# ----------------------------------------------------------------------------
# Forward pass (Pallas-backed)
# ----------------------------------------------------------------------------
def res_block_encoder_optimized(x, p):
    sc = conv2d(avg_pool2(x), p["bypass"]["w"], p["bypass"]["b"], stride=1, pad=0)
    h = conv2d(x, p["conv1"]["w"], p["conv1"]["b"], stride=1, pad=1, act_out=True)
    h = conv2d(h, p["conv2"]["w"], p["conv2"]["b"], stride=2, pad=1)
    return h + sc


def res_block_encoder(x, p):
    sc = conv2d(avg_pool2(x), p["bypass"]["w"], p["bypass"]["b"], stride=1, pad=0)
    h = conv2d(x, p["conv1"]["w"], p["conv1"]["b"], stride=1, pad=1,
               act_in=True, act_out=True)
    h = conv2d(h, p["conv2"]["w"], p["conv2"]["b"], stride=2, pad=1)
    return h + sc


def res_discriminator_forward(x_nchw, params):
    x = jnp.transpose(x_nchw, (0, 2, 3, 1)).astype(jnp.float32)   # NCHW -> NHWC
    out = res_block_encoder_optimized(x, params["block0"])
    for i in range(params["layers"] - 1):
        out = res_block_encoder(out, params["encoder%d" % i])
    out = head_conv_1x1(out, params["conv"]["w"], params["conv"]["b"])
    return jnp.transpose(out, (0, 3, 1, 2))                       # back to NCHW


# ----------------------------------------------------------------------------
# Pure-JAX reference (lax conv) for correctness checking
# ----------------------------------------------------------------------------
def _ref_conv(x, w, b, stride, pad):
    w_hwio = jnp.transpose(w, (2, 3, 1, 0))
    y = jax.lax.conv_general_dilated(
        x, w_hwio, (stride, stride), [(pad, pad), (pad, pad)],
        dimension_numbers=("NHWC", "HWIO", "NHWC"))
    return y + b.reshape(1, 1, 1, -1)


def _ref_lrelu(x):
    return jnp.where(x >= 0, x, NEG_SLOPE * x)


def _ref_avgpool2(x):
    N, H, W, C = x.shape
    return x.reshape(N, H // 2, 2, W // 2, 2, C).mean(axis=(2, 4))


def res_discriminator_reference(x_nchw, params):
    x = jnp.transpose(x_nchw, (0, 2, 3, 1)).astype(jnp.float32)

    def block0(x, p):
        h = _ref_conv(x, p["conv1"]["w"], p["conv1"]["b"], 1, 1)
        h = _ref_conv(_ref_lrelu(h), p["conv2"]["w"], p["conv2"]["b"], 2, 1)
        sc = _ref_conv(_ref_avgpool2(x), p["bypass"]["w"], p["bypass"]["b"], 1, 0)
        return h + sc

    def block(x, p):
        h = _ref_conv(_ref_lrelu(x), p["conv1"]["w"], p["conv1"]["b"], 1, 1)
        h = _ref_conv(_ref_lrelu(h), p["conv2"]["w"], p["conv2"]["b"], 2, 1)
        sc = _ref_conv(_ref_avgpool2(x), p["bypass"]["w"], p["bypass"]["b"], 1, 0)
        return h + sc

    out = block0(x, params["block0"])
    for i in range(params["layers"] - 1):
        out = block(out, params["encoder%d" % i])
    out = _ref_conv(_ref_lrelu(out), params["conv"]["w"], params["conv"]["b"], 1, 0)
    return jnp.transpose(out, (0, 3, 1, 2))


# ----------------------------------------------------------------------------
if __name__ == "__main__":
    key = jax.random.PRNGKey(0)
    k_param, k_x = jax.random.split(key)

    # Small synthetic config (same structure, reduced widths): input_nc=3,
    # ndf=8, img_f=32, layers=3  ->  channels 8 -> 16 -> 32 -> 1.
    params = init_res_discriminator_params(k_param, input_nc=3, ndf=8,
                                           img_f=32, layers=3)

    x = jax.random.normal(k_x, (2, 3, 16, 16), jnp.float32)   # NCHW like PyTorch

    out = jax.block_until_ready(res_discriminator_forward(x, params))
    assert out.shape == (2, 1, 2, 2), out.shape

    ref = jax.block_until_ready(res_discriminator_reference(x, params))
    # bf16 MXU operands (f32 accumulation) -> widened tolerance vs f32 reference.
    if not jnp.allclose(out, ref, atol=5e-2, rtol=5e-2):
        err = float(jnp.max(jnp.abs(out - ref)))
        raise AssertionError("Pallas output does not match reference "
                             f"(max abs err {err:.4g})")

    print("KERNEL_OK")
</pallas_src>

<mosaic_0001>
module attributes {stable_mosaic.version = 11 : i64} {
  func.func @_conv_tap_mm_kernel(%arg0: i32, %arg1: i32, %arg2: i32, %arg3: memref<1x1x1x72x3xbf16, #tpu.memory_space<vmem>>, %arg4: memref<1x3x128xbf16, #tpu.memory_space<vmem>>, %arg5: memref<1x128xf32, #tpu.memory_space<vmem>>, %arg6: memref<1x1x64x128xf32, #tpu.memory_space<vmem>>) attributes {dimension_semantics = [#tpu.dimension_semantics<parallel>, #tpu.dimension_semantics<parallel>, #tpu.dimension_semantics<parallel>], iteration_bounds = array<i64: 2, 1, 1>, scalar_prefetch = 0 : i64, scratch_operands = 0 : i64, tpu.core_type = #tpu.core_type<tc>, window_params = [{transform_indices = @transform_0, window_bounds = array<i64: 1, 1, 1, 72, 3>}, {transform_indices = @transform_1, window_bounds = array<i64: 1, 3, 128>}, {transform_indices = @transform_2, window_bounds = array<i64: 1, 128>}, {transform_indices = @transform_3, window_bounds = array<i64: 1, 1, 64, 128>}]} {
    %c0 = arith.constant 0 : index
    %c0_0 = arith.constant 0 : index
    %c0_1 = arith.constant 0 : index
    %c0_2 = arith.constant 0 : index
    %c0_3 = arith.constant 0 : index
    %0 = vector.load %arg3[%c0, %c0_0, %c0_1, %c0_2, %c0_3] : memref<1x1x1x72x3xbf16, #tpu.memory_space<vmem>>, vector<1x1x1x72x3xbf16>
    %1 = vector.shape_cast %0 : vector<1x1x1x72x3xbf16> to vector<1x72x3xbf16>
    %cst = arith.constant 0.000000e+00 : f32
    %2 = vector.broadcast %cst : f32 to vector<64x128xf32>
    %3 = vector.extract_strided_slice %1 {offsets = [0, 0, 0], sizes = [1, 64, 3], strides = [1, 1, 1]} : vector<1x72x3xbf16> to vector<1x64x3xbf16>
    %4 = vector.shape_cast %3 : vector<1x64x3xbf16> to vector<64x3xbf16>
    %c0_4 = arith.constant 0 : index
    %c0_5 = arith.constant 0 : index
    %c0_6 = arith.constant 0 : index
    %5 = vector.load %arg4[%c0_4, %c0_5, %c0_6] : memref<1x3x128xbf16, #tpu.memory_space<vmem>>, vector<1x3x128xbf16>
    %6 = vector.shape_cast %5 : vector<1x3x128xbf16> to vector<3x128xbf16>
    %cst_7 = arith.constant dense<0.000000e+00> : vector<64x128xf32>
    %7 = tpu.matmul %4, %6, %cst_7 {dimension_numbers = #tpu.dot_dimension_numbers<[1], [0], [0], [1], [0, 0, 1, 1], [], []>} : vector<64x3xbf16>, vector<3x128xbf16>, vector<64x128xf32> -> vector<64x128xf32>
    %8 = arith.addf %2, %7 : vector<64x128xf32>
    %c0_8 = arith.constant 0 : index
    %c0_9 = arith.constant 0 : index
    %9 = vector.load %arg5[%c0_8, %c0_9] : memref<1x128xf32, #tpu.memory_space<vmem>>, vector<1x128xf32>
    %10 = vector.broadcast %9 : vector<1x128xf32> to vector<64x128xf32>
    %11 = arith.addf %8, %10 : vector<64x128xf32>
    %c0_10 = arith.constant 0 : index
    %c0_11 = arith.constant 0 : index
    %c0_12 = arith.constant 0 : index
    %c0_13 = arith.constant 0 : index
    %12 = vector.load %arg6[%c0_10, %c0_11, %c0_12, %c0_13] : memref<1x1x64x128xf32, #tpu.memory_space<vmem>>, vector<1x1x64x128xf32>
    %13 = vector.shape_cast %12 : vector<1x1x64x128xf32> to vector<64x128xf32>
    %14 = vector.shape_cast %11 : vector<64x128xf32> to vector<1x1x64x128xf32>
    tpu.vector_store %arg6[%c0_10, %c0_11, %c0_12, %c0_13], %14 {strides = array<i32>} : memref<1x1x64x128xf32, #tpu.memory_space<vmem>>, vector<1x1x64x128xf32>,
    return
  }
  func.func @transform_0(%arg0: i32, %arg1: i32, %arg2: i32) -> (i32, i32, i32, i32, i32) {
    %c0_i32 = arith.constant 0 : i32
    %c0_i32_0 = arith.constant 0 : i32
    %c0_i32_1 = arith.constant 0 : i32
    %c0_i32_2 = arith.constant 0 : i32
    return %arg0, %arg1, %c0_i32, %c0_i32_0, %c0_i32_1 : i32, i32, i32, i32, i32
  }
  func.func @transform_1(%arg0: i32, %arg1: i32, %arg2: i32) -> (i32, i32, i32) {
    %c0_i32 = arith.constant 0 : i32
    %c0_i32_0 = arith.constant 0 : i32
    %c0_i32_1 = arith.constant 0 : i32
    return %c0_i32, %c0_i32_0, %arg2 : i32, i32, i32
  }
  func.func @transform_2(%arg0: i32, %arg1: i32, %arg2: i32) -> (i32, i32) {
    %c0_i32 = arith.constant 0 : i32
    %c0_i32_0 = arith.constant 0 : i32
    return %c0_i32, %arg2 : i32, i32
  }
  func.func @transform_3(%arg0: i32, %arg1: i32, %arg2: i32) -> (i32, i32, i32, i32) {
    %c0_i32 = arith.constant 0 : i32
    %c0_i32_0 = arith.constant 0 : i32
    return %arg0, %arg1, %c0_i32, %arg2 : i32, i32, i32, i32
  }
}

</mosaic_0001>

<llo_original>
// kernel: tpu_custom_call.1
$region0: #{tpu_custom_call.1}
  #allocation0 [shape = 'u32[]', space=smem, size = 0x4, offset = 0x4, fixed_abs, tag = 'smem constant byte address 0x4 - core index']
  #allocation1 [shape = 'u32[72,128]{1,0:T(1,128)}', space=vmem, size = 0x9000, scoped, tag = 'internal scratch']
  %s0 = inlined_call_operand.vmem [shape: bf16[2,1,1,72,3], index: 0, kind: input, shape index: {}]
  %s1 = inlined_call_operand.vmem [shape: bf16[1,3,128], index: 1, kind: input, shape index: {}]
  %s2 = inlined_call_operand.vmem [shape: f32[1,128], index: 2, kind: input, shape index: {}]
  %s3 = inlined_call_operand.hbm [shape: f32[2,1,64,128], index: 3, kind: output, shape index: {}]
  %s4 = sld [smem:[#allocation0]]
  $region45: #{tpu_custom_call.1} parent=0
    _
  %s6 = ssub.s32 1, %s4
  %s7 = scalar_select 0, %s6, %s4
  $region1: #{tpu_custom_call.1} parent=0
    #allocation2 [shape = 'u8[65536]{0}', space=vmem, size = 0x10000, scoped, tag = 'output window, operand 0']
    #allocation3 [shape = 's32[2]{0}', space=sflag, size = 0x8, scoped, tag = 'scoped memory for tpu_custom_call.1']
    %8 = vsyncpa [#allocation3], 0
    %s9 = scalar_lea.sflag [#allocation3], 1
    %10 = vsyncpa %s9, 0
    loop: start=0, step=1, limit=4
    $region2: #{tpu_custom_call.1} parent=1 // loop_pre_header
      _
    $region3: #{tpu_custom_call.1} parent=1 // loop_header
      %s12 = sphi 0, %s16
      %p13 = scmp.ge.s32.totalorder %s12, 4
      %s19 = sphi 0, %s38
      %s20 = sphi 0, %s34
      %s21 = sphi 0, %s30
      %s22 = sphi 0, %s19
      %s23 = sphi 0, %s20
      %s24 = sphi 0, %s21
      %s25 = sphi 0, %s22
      %s26 = sphi 0, %s23
      %s27 = sphi 0, %s24
      %s43 = sphi 0, %s45
      %s46 = sphi 0, %s43
      %s47 = sphi 0, %s46
      %s63 = sphi 0, %s47
      %s69 = sphi 0, %s71
      %s72 = sphi 0, %s69
      %s73 = sphi 0, %s72
      %s89 = sphi 0, %s73
      %s95 = sphi 0, %s97
      %s98 = sphi 0, %s95
      %s99 = sphi 0, %s98
      %s115 = sphi 0, %s99
      %s125 = sphi 0, %s127
      %s128 = sphi 0, %s125
      %s129 = sphi 0, %s128
      %s145 = sphi 0, %s129
    $region4: #{tpu_custom_call.1} parent=1 // loop_header_branch
      %15 = sbr.rel (%p13) target = $region8
    $region5: #{tpu_custom_call.1} parent=1 // loop_body
      %s17 = ssub.s32 %s12, 1
      %s18 = ssub.s32 %s12, 2
      %s28 = sadd.s32 1, %s21
      %p29 = scmp.ge.s32.totalorder %s28, 1
      %s30 = scalar_select %p29, 0, %s28
      %s31 = sadd.s32 1, %s20
      %s32 = scalar_select %p29, %s31, %s20
      %p33 = scmp.ge.s32.totalorder %s32, 1
      %s34 = scalar_select %p33, 0, %s32
      %s35 = sadd.s32 1, %s19
      %s36 = scalar_select %p33, %s35, %s19
      %p37 = scmp.ge.s32.totalorder %s36, 2
      %s38 = scalar_select %p37, 0, %s36
      %s39 = ssub.s32 %s19, %s38
      %s40 = ssub.s32 %s20, %s34
      %s41 = sor.u32 %s39, %s40
      %p42 = scmp.eq.s32.totalorder %s41, 0
      %s44 = sadd.s32 %s43, 1
      %s45 = scalar_select %p42, %s43, %s44
      %p48 = pneg %p42
      %p49 = scmp.eq.s32.totalorder %s12, 1
      %p50 = por %p48, %p49
      %p51 = scmp.ne.s32.totalorder %s43, %s46
      %p52 = scmp.eq.s32.totalorder %s12, 0
      %p53 = por %p51, %p52
      %p54 = scmp.ne.s32.totalorder %s43, %s46
      %p55 = scmp.eq.s32.totalorder %s17, 1
      %p56 = por %p54, %p55
      %p57 = scmp.ne.s32.totalorder %s46, %s47
      %p58 = scmp.eq.s32.totalorder %s17, 0
      %p59 = por %p57, %p58
      %p60 = scmp.ne.s32.totalorder %s46, %s47
      %p61 = scmp.eq.s32.totalorder %s18, 1
      %p62 = por %p60, %p61
      %p64 = scmp.ne.s32.totalorder %s47, %s63
      %p65 = scmp.eq.s32.totalorder %s18, 0
      %p66 = por %p64, %p65
      %s67 = ssub.s32 %s21, %s30
      %p68 = scmp.eq.s32.totalorder %s67, 0
      %s70 = sadd.s32 %s69, 1
      %s71 = scalar_select %p68, %s69, %s70
      %p74 = pneg %p68
      %p75 = scmp.eq.s32.totalorder %s12, 1
      %p76 = por %p74, %p75
      %p77 = scmp.ne.s32.totalorder %s69, %s72
      %p78 = scmp.eq.s32.totalorder %s12, 0
      %p79 = por %p77, %p78
      %p80 = scmp.ne.s32.totalorder %s69, %s72
      %p81 = scmp.eq.s32.totalorder %s17, 1
      %p82 = por %p80, %p81
      %p83 = scmp.ne.s32.totalorder %s72, %s73
      %p84 = scmp.eq.s32.totalorder %s17, 0
      %p85 = por %p83, %p84
      %p86 = scmp.ne.s32.totalorder %s72, %s73
      %p87 = scmp.eq.s32.totalorder %s18, 1
      %p88 = por %p86, %p87
      %p90 = scmp.ne.s32.totalorder %s73, %s89
      %p91 = scmp.eq.s32.totalorder %s18, 0
      %p92 = por %p90, %p91
      %s93 = ssub.s32 %s21, %s30
      %p94 = scmp.eq.s32.totalorder %s93, 0
      %s96 = sadd.s32 %s95, 1
      %s97 = scalar_select %p94, %s95, %s96
      %p100 = pneg %p94
      %p101 = scmp.eq.s32.totalorder %s12, 1
      %p102 = por %p100, %p101
      %p103 = scmp.ne.s32.totalorder %s95, %s98
      %p104 = scmp.eq.s32.totalorder %s12, 0
      %p105 = por %p103, %p104
      %p106 = scmp.ne.s32.totalorder %s95, %s98
      %p107 = scmp.eq.s32.totalorder %s17, 1
      %p108 = por %p106, %p107
      %p109 = scmp.ne.s32.totalorder %s98, %s99
      %p110 = scmp.eq.s32.totalorder %s17, 0
      %p111 = por %p109, %p110
      %p112 = scmp.ne.s32.totalorder %s98, %s99
      %p113 = scmp.eq.s32.totalorder %s18, 1
      %p114 = por %p112, %p113
      %p116 = scmp.ne.s32.totalorder %s99, %s115
      %p117 = scmp.eq.s32.totalorder %s18, 0
      %p118 = por %p116, %p117
      %s119 = ssub.s32 %s19, %s38
      %s120 = ssub.s32 %s20, %s34
      %s121 = sor.u32 %s119, %s120
      %s122 = ssub.s32 %s21, %s30
      %s123 = sor.u32 %s121, %s122
      %p124 = scmp.eq.s32.totalorder %s123, 0
      %s126 = sadd.s32 %s125, 1
      %s127 = scalar_select %p124, %s125, %s126
      %p130 = pneg %p124
      %p131 = scmp.eq.s32.totalorder %s12, 1
      %p132 = por %p130, %p131
      %p133 = scmp.ne.s32.totalorder %s125, %s128
      %p134 = scmp.eq.s32.totalorder %s12, 0
      %p135 = por %p133, %p134
      %p136 = scmp.ne.s32.totalorder %s125, %s128
      %p137 = scmp.eq.s32.totalorder %s17, 1
      %p138 = por %p136, %p137
      %p139 = scmp.ne.s32.totalorder %s128, %s129
      %p140 = scmp.eq.s32.totalorder %s17, 0
      %p141 = por %p139, %p140
      %p142 = scmp.ne.s32.totalorder %s128, %s129
      %p143 = scmp.eq.s32.totalorder %s18, 1
      %p144 = por %p142, %p143
      %p146 = scmp.ne.s32.totalorder %s129, %s145
      %p147 = scmp.eq.s32.totalorder %s18, 0
      %p148 = por %p146, %p147
      %p149 = scmp.le.s32.totalorder 1, %s12
      %p150 = scmp.lt.s32.totalorder %s12, 3
      %p151 = pnand %p149, %p150
      %p152 = pneg %p151
      // Predicated region
      $region9: #{tpu_custom_call.1} parent=5 // pred_check
        _
      $region10: #{tpu_custom_call.1} parent=5 // pred_check_branch
        %154 = sbr.rel (%p151) target = $region12
      $region11: #{tpu_custom_call.1} parent=5 // pred_region
        %s155 = ssub.s32 %s12, 1
        // Predicated region
        $region13: #{tpu_custom_call.1} parent=11 // pred_check
          %p156 = pneg %p85
        $region14: #{tpu_custom_call.1} parent=11 // pred_check_branch
          %158 = sbr.rel (%p156) target = $region16
        $region15: #{tpu_custom_call.1} parent=11 // pred_region
          %p159 = scmp.lt.s32.totalorder %s24, 0
          %s160 = scalar_select %p159, %s24, 0
          %s161 = smul.addr %s160, 2
          %s162 = scalar_lea.vmem %s1, %s161
        $region16: #{tpu_custom_call.1} parent=11 // pred_fallthru
          _
        // Predicated region
        $region17: #{tpu_custom_call.1} parent=11 // pred_check
          %p163 = pneg %p111
        $region18: #{tpu_custom_call.1} parent=11 // pred_check_branch
          %165 = sbr.rel (%p163) target = $region20
        $region19: #{tpu_custom_call.1} parent=11 // pred_region
          %p166 = scmp.lt.s32.totalorder %s24, 0
          %s167 = scalar_select %p166, %s24, 0
          %s168 = scalar_lea.vmem %s2, %s167
        $region20: #{tpu_custom_call.1} parent=11 // pred_fallthru
          _
      $region12: #{tpu_custom_call.1} parent=5 // pred_fallthru
        _
      %p169 = scmp.lt.s32.totalorder %s12, 2
      // Predicated region
      $region21: #{tpu_custom_call.1} parent=5 // pred_check
        %p170 = pneg %p169
      $region22: #{tpu_custom_call.1} parent=5 // pred_check_branch
        %172 = sbr.rel (%p170) target = $region24
      $region23: #{tpu_custom_call.1} parent=5 // pred_region
        // Predicated region
        $region25: #{tpu_custom_call.1} parent=23 // pred_check
          %p173 = pneg %p53
        $region26: #{tpu_custom_call.1} parent=23 // pred_check_branch
          %175 = sbr.rel (%p173) target = $region28
        $region27: #{tpu_custom_call.1} parent=23 // pred_region
          %p176 = scmp.lt.s32.totalorder %s19, 1
          %s177 = scalar_select %p176, %s19, 1
          %p178 = scmp.lt.s32.totalorder %s20, 0
          %s179 = scalar_select %p178, %s20, 0
          %s180 = smul.addr %s179, 9
          %s181 = smul.addr %s177, 9
          %s182 = sadd.s32 %s180, %s181
          %s183 = smul.addr %s182, 4
          %s184 = scalar_lea.vmem %s0, %s183
        $region28: #{tpu_custom_call.1} parent=23 // pred_fallthru
          _
      $region24: #{tpu_custom_call.1} parent=5 // pred_fallthru
        _
      %p185 = scmp.le.s32.totalorder 1, %s12
      %p186 = scmp.lt.s32.totalorder %s12, 3
      %p187 = pnand %p185, %p186
      %p188 = pneg %p187
      // Predicated region
      $region29: #{tpu_custom_call.1} parent=5 // pred_check
        _
      $region30: #{tpu_custom_call.1} parent=5 // pred_check_branch
        %190 = sbr.rel (%p187) target = $region32
      $region31: #{tpu_custom_call.1} parent=5 // pred_region
        %s191 = ssub.s32 %s12, 1
        %p192 = scmp.lt.s32.totalorder %s22, 1
        %s193 = scalar_select %p192, %s22, 1
        %p194 = scmp.lt.s32.totalorder %s23, 0
        %s195 = scalar_select %p194, %s23, 0
        %s196 = smul.addr %s195, 9
        %s197 = smul.addr %s193, 9
        %s198 = sadd.s32 %s196, %s197
        %s199 = smul.addr %s198, 4
        %s200 = scalar_lea.vmem %s0, %s199
        %p201 = pneg %p59
        %p202 = pneg %p56
        %p203 = scmp.lt.s32.totalorder %s24, 0
        %s204 = scalar_select %p203, %s24, 0
        %s205 = smul.addr %s204, 2
        %s206 = scalar_lea.vmem %s1, %s205
        %p207 = pneg %p85
        %p208 = pneg %p82
        %p209 = scmp.lt.s32.totalorder %s24, 0
        %s210 = scalar_select %p209, %s24, 0
        %s211 = scalar_lea.vmem %s2, %s210
        %p212 = pneg %p111
        %p213 = pneg %p108
        %p214 = pneg %p141
        %p215 = pneg %p138
        %s216 = sand.u32 %s128, 1
        %s217 = scalar_lea.sflag [#allocation3], %s216
        %s218 = sand.u32 %s128, 1
        %s219 = smul.addr %s218, 64
        %s220 = scalar_lea.vmem [#allocation2], %s219
        %p221 = scmp.lt.s32.totalorder %s22, 1
        %s222 = scalar_select %p221, %s22, 1
        %p223 = scmp.lt.s32.totalorder %s23, 0
        %s224 = scalar_select %p223, %s23, 0
        %s225 = smul.addr %s224, 9
        %s226 = smul.addr %s222, 9
        %s227 = sadd.s32 %s225, %s226
        %s228 = smul.addr %s227, 4
        %s229 = scalar_lea.vmem %s0, %s228
        %p230 = scmp.lt.s32.totalorder %s24, 0
        %s231 = scalar_select %p230, %s24, 0
        %s232 = smul.addr %s231, 2
        %s233 = scalar_lea.vmem %s1, %s232
        %p234 = scmp.lt.s32.totalorder %s24, 0
        %s235 = scalar_select %p234, %s24, 0
        %s236 = scalar_lea.vmem %s2, %s235
        %v238 = vld [vmem:[%s229] sm:$0xf]
        %v239 = vld [vmem:[%s229 + $0x4] sm:$0xf]
        %v240 = vld [vmem:[%s229 + $0x8] sm:$0xf]
        %v241 = vld [vmem:[%s229 + $0xc] sm:$0xf]
        %v242 = vld [vmem:[%s229 + $0x10] sm:$0xf]
        %v243 = vld [vmem:[%s229 + $0x14] sm:$0xf]
        %v244 = vld [vmem:[%s229 + $0x18] sm:$0xf]
        %v245 = vld [vmem:[%s229 + $0x1c] sm:$0xf]
        %v246 = vld [vmem:[%s233] sm:$0x3]
        %v247 = vld [vmem:[%s236] sm:$0x1]
        %v249 = vperm.slane %v247, 0
        %v259 = vunpack.c.l.b16 %v238
        %v260 = vunpack.c.l.b16 %v239
        %v261 = vunpack.c.l.b16 %v240
        %v262 = vunpack.c.l.b16 %v241
        %v263 = vunpack.c.l.b16 %v242
        %v264 = vunpack.c.l.b16 %v243
        %v265 = vunpack.c.l.b16 %v244
        %v266 = vunpack.c.l.b16 %v245
        %v267 = vpack.c.b16 %v260, %v259
        %v268 = vpack.c.b16 %v262, %v261
        %v269 = vpack.c.b16 %v264, %v263
        %v270 = vpack.c.b16 %v266, %v265
        %vm271 = vcmask 23552
        %v273 = vsel %vm271, %v267, 0
        %v276 = vsel %vm271, %v268, 0
        %v279 = vsel %vm271, %v269, 0
        %v282 = vsel %vm271, %v270, 0
        %vm284 = vcmask 1040384
        %vm285 = vcmask 1041408
        %v286 = vsel %vm284, 4294967295, 65535
        %v287 = vsel %vm285, %v286, 0
        %v289 = vand.u32 %v246, %v287
        %291 = vmatpush.bf16.msra.mxu0 0
        %292 = vmatpush.bf16.msra.mxu0 0
        %293 = vmatpush.bf16.msra.mxu0 0
        %294 = vmatpush.bf16.msra.mxu0 0
        %295 = vmatpush.bf16.msra.mxu0 0
        %296 = vmatpush.bf16.msra.mxu0 0
        %297 = vmatpush.bf16.msra.mxu0 0
        %298 = vmatpush.bf16.msra.mxu0 %v289
        %299 = vmatmul.bf16.gmra.mxu0 %v273
        %v300 = vpop.f32.mrf.mxu0
        %v301 = vadd.f32 %v249, %v300
        %v302 = vpop.f32.mrf.mxu0
        %v303 = vadd.f32 %v249, %v302
        %304 = vmatmul.bf16.gmra.mxu0 %v276
        %v305 = vpop.f32.mrf.mxu0
        %v306 = vadd.f32 %v249, %v305
        %v307 = vpop.f32.mrf.mxu0
        %v308 = vadd.f32 %v249, %v307
        %309 = vmatmul.bf16.gmra.mxu0 %v279
        %v310 = vpop.f32.mrf.mxu0
        %v311 = vadd.f32 %v249, %v310
        %v312 = vpop.f32.mrf.mxu0
        %v313 = vadd.f32 %v249, %v312
        %314 = vmatmul.bf16.gmra.mxu0 %v282
        %v315 = vpop.f32.mrf.mxu0
        %v316 = vadd.f32 %v249, %v315
        %v317 = vpop.f32.mrf.mxu0
        %v318 = vadd.f32 %v249, %v317
        %319 = vdwg.mxu0
        %320 = vst [vmem:[%s220] sm:$0xff] %v301
        %321 = vst [vmem:[%s220 + $0x8] sm:$0xff] %v303
        %322 = vst [vmem:[%s220 + $0x10] sm:$0xff] %v306
        %323 = vst [vmem:[%s220 + $0x18] sm:$0xff] %v308
        %324 = vst [vmem:[%s220 + $0x20] sm:$0xff] %v311
        %325 = vst [vmem:[%s220 + $0x28] sm:$0xff] %v313
        %326 = vst [vmem:[%s220 + $0x30] sm:$0xff] %v316
        %327 = vst [vmem:[%s220 + $0x38] sm:$0xff] %v318
        %s328 = sand.u32 %s128, 1
        %s329 = scalar_lea.sflag [#allocation3], %s328
        %s330 = sand.u32 %s128, 1
        %s331 = smul.addr %s330, 64
        %s332 = scalar_lea.vmem [#allocation2], %s331
        // Predicated region
        $region33: #{tpu_custom_call.1} parent=31 // pred_check
          %p333 = pneg %p138
        $region34: #{tpu_custom_call.1} parent=31 // pred_check_branch
          %335 = sbr.rel (%p333) target = $region36
        $region35: #{tpu_custom_call.1} parent=31 // pred_region
          %337 = vsyncadd %s329, 0
          %s338 = smul.addr %s23, 8
          %s339 = sadd.s32 %s24, %s338
          %s340 = smul.addr %s22, 8
          %s341 = sadd.s32 %s339, %s340
          %s342 = smul.addr %s341, 8
          %s343 = scalar_lea.hbm %s3, %s342
          %s344 = sshll.u32 %s332, 4
          %s345 = int_to_ptr.vmem [resolvable:$true] %s344
          %s346 = sshll.u32 %s343, 4
          %s347 = int_to_ptr.hbm [resolvable:$true] %s346
          %352 = dma.vmem_to_hbm [thread:$0]  %s345, 1024, %s347, %s329, 128, 128, 8
        $region36: #{tpu_custom_call.1} parent=31 // pred_fallthru
          _
      $region32: #{tpu_custom_call.1} parent=5 // pred_fallthru
        _
      %p353 = scmp.le.s32.totalorder 2, %s12
      // Predicated region
      $region37: #{tpu_custom_call.1} parent=5 // pred_check
        %p354 = pneg %p353
      $region38: #{tpu_custom_call.1} parent=5 // pred_check_branch
        %356 = sbr.rel (%p354) target = $region40
      $region39: #{tpu_custom_call.1} parent=5 // pred_region
        %s357 = ssub.s32 %s12, 2
        // Predicated region
        $region41: #{tpu_custom_call.1} parent=39 // pred_check
          %p358 = pneg %p144
        $region42: #{tpu_custom_call.1} parent=39 // pred_check_branch
          %360 = sbr.rel (%p358) target = $region44
        $region43: #{tpu_custom_call.1} parent=39 // pred_region
          %s361 = sand.u32 %s129, 1
          %s362 = scalar_lea.sflag [#allocation3], %s361
          %s363 = sand.u32 %s129, 1
          %s364 = smul.addr %s363, 64
          %s365 = scalar_lea.vmem [#allocation2], %s364
          %367 = dma.done %s362, 1024
        $region44: #{tpu_custom_call.1} parent=39 // pred_fallthru
          _
      $region40: #{tpu_custom_call.1} parent=5 // pred_fallthru
        _
    $region6: #{tpu_custom_call.1} parent=1 // loop_footer
      %s16 = sadd.s32 1, %s12
    $region7: #{tpu_custom_call.1} parent=1 // loop_footer_branch
      %11 = sbr.rel target = $region3
    $region8: #{tpu_custom_call.1} parent=1 // loop_exit
      _
    %368 = vsyncpa [#allocation3], 1
    %s369 = scalar_lea.sflag [#allocation3], 1
    %370 = vsyncpa %s369, 1

</llo_original>
